<compile_context>
chip_gen: v5e
topology: v5e:2x2
jax: 0.10.0
libtpu: 0.0.40
codegen_flags: <defaults>
</compile_context>

<pallas_src>
import functools
import math

import jax
import jax.numpy as jnp
from jax.experimental import pallas as pl
from jax.experimental.pallas import tpu as pltpu

DIRE_OUTPUT_SIZE = 64     # bottom_to_output_size[BottomNeuralModel.DIRE]
EMBEDDING_SIZE = 32
NEG_SLOPE = 0.2           # PyG GATConv default negative_slope
MASK_NEG = -1e30          # additive mask value for non-edges


# ----------------------------------------------------------------------------
# Kernel
# ----------------------------------------------------------------------------
def _attention_block(h_aug, mask_bias, bias, d_out):
    """One GATConv attention step on the block-diagonal (disjoint-union) graph.

    h_aug     : [M, d_pad] f32 ; cols [0:d_out]=W x, col d_out=(Wx)@a_src,
                col d_out+1=(Wx)@a_dst, remaining columns zero padding.
    mask_bias : [M, M] f32 additive mask (0 on edge/self-loop, -1e30 elsewhere).
    bias      : [1, d_out] f32
    returns     [M, d_out] f32 (pre-activation)
    """
    h = h_aug[:, :d_out]                                       # [M, d_out]
    a_src_row = jnp.transpose(h_aug[:, d_out:d_out + 1])       # [1, M]
    a_dst_col = h_aug[:, d_out + 1:d_out + 2]                  # [M, 1]

    # e[i, j] = LeakyReLU(a_dst[i] + a_src[j])  (f32, VPU)
    e = a_dst_col + a_src_row
    e = jnp.where(e > 0, e, NEG_SLOPE * e)
    e = e + mask_bias                                          # non-edges -> -1e30

    # Row softmax over incoming edges; self loops keep every row finite.
    e_max = jnp.max(e, axis=-1, keepdims=True)
    p = jnp.exp(e - e_max)                                     # masked -> exactly 0
    inv = pl.reciprocal(jnp.sum(p, axis=-1, keepdims=True), approx=True)
    alpha = (p * inv).astype(jnp.bfloat16)

    # Aggregation: ONE [M, M] @ [M, d_out] MXU matmul (bf16, f32 accumulate).
    out = jnp.dot(alpha, h.astype(jnp.bfloat16),
                  preferred_element_type=jnp.float32)
    return out + bias


def _gat_kernel(x_ref, mask_ref, w1_ref, b1_ref, *rest, d_out, two_layered):
    if two_layered:
        w2_ref, b2_ref, out_ref = rest
    else:
        (out_ref,) = rest

    mask_bias = mask_ref[...]                                  # [M, M] f32

    # layer 1: V-mean + linear + attention projections = one bf16 matmul.
    h1 = jnp.dot(x_ref[...], w1_ref[...], preferred_element_type=jnp.float32)
    out = _attention_block(h1, mask_bias, b1_ref[...], d_out)
    out = jnp.maximum(out, 0.0)                                # relu after gat1

    if two_layered:
        # layer 2 fused in the same kernel; intermediate never leaves VMEM.
        h2 = jnp.dot(out.astype(jnp.bfloat16), w2_ref[...],
                     preferred_element_type=jnp.float32)
        out = _attention_block(h2, mask_bias, b2_ref[...], d_out)
        # no relu after gat2 (matches the torch module)

    out_ref[...] = out.astype(out_ref.dtype)


# ----------------------------------------------------------------------------
# Host-side glue
# ----------------------------------------------------------------------------
def _round_up(x, m):
    return -(-x // m) * m


def _detect_num_cores():
    """Best-effort TensorCores-per-device detection (2 on dual-TC chips)."""
    try:
        dev = jax.devices()[0]
        for attr in ("num_cores", "core_count"):
            v = getattr(dev, attr, None)
            if isinstance(v, int) and v > 0:
                return v
        kind = str(getattr(dev, "device_kind", "")).lower()
        if "v4" in kind or "v7" in kind:
            return 2
    except Exception:
        pass
    return 1


def _choose_bt(batch, n, *, max_rows=512, grid_steps=None):
    """Graphs per grid step: fill MXU rows (bt*N >= 128 when the batch allows),
    collapse the grid to 1 step on single-TC chips / ~2 on dual-TC chips, and
    cap bt*N so the [M, M] mask stays tiny in VMEM."""
    if grid_steps is None:
        grid_steps = max(1, _detect_num_cores())
    bt = min(batch, max(1, max_rows // n))
    if grid_steps > 1 and batch > 1:
        bt = min(bt, max(1, -(-batch // grid_steps)))
    mult = 8 // math.gcd(n, 8)           # keep bt*N a multiple of 8 (sublane dim)
    return mult * (-(-bt // mult))


def _augment_weights(w, att_src, att_dst, v, d_pad):
    """Fold the V-mean and the attention projections into one matrix.

    Returns [v*D_in, d_pad] = [ tile(W/v) | W_rep@a_src^T | W_rep@a_dst^T | 0 ].
    Zero-padded to d_pad columns so in-kernel column slicing stays lane-clean.
    """
    w_rep = jnp.tile(w / float(v), (v, 1)) if v > 1 else w
    a_s = w_rep @ att_src.reshape(-1, 1)
    a_d = w_rep @ att_dst.reshape(-1, 1)
    aug = jnp.concatenate([w_rep, a_s, a_d], axis=1)
    pad = d_pad - aug.shape[1]
    if pad > 0:
        aug = jnp.concatenate(
            [aug, jnp.zeros((aug.shape[0], pad), aug.dtype)], axis=1)
    return aug


def dense_adjacency(edge_index, num_nodes):
    """adj[dst, src] = 1 for each edge src -> dst, plus self loops (f32).

    Padded / invalid edge indices (e.g. -1) are dropped instead of wrapping.
    """
    src = edge_index[0].astype(jnp.int32)
    dst = edge_index[1].astype(jnp.int32)
    valid = (src >= 0) & (dst >= 0) & (src < num_nodes) & (dst < num_nodes)
    src_s = jnp.where(valid, src, num_nodes)
    dst_s = jnp.where(valid, dst, num_nodes)
    adj = jnp.zeros((num_nodes, num_nodes), jnp.float32)
    adj = adj.at[dst_s, src_s].set(1.0, mode="drop")
    diag = jnp.arange(num_nodes)
    adj = adj.at[diag, diag].set(1.0)            # PyG add_self_loops=True
    return adj


def gat_forward_pallas(x, adj, params, *, two_layered, shared_adj,
                       grid_steps=None, max_rows=512):
    """x: [B, N, V, D_in] f32 ; adj: [N, N] (shared_adj) or [B, N, N]."""
    B, N, V, D_in = x.shape
    d_out = params["w1"].shape[1]
    d_pad = _round_up(d_out + 2, 64)

    bt = _choose_bt(B, N, max_rows=max_rows, grid_steps=grid_steps)
    pad = (-B) % bt
    Bp = B + pad
    G = Bp // bt
    M = bt * N

    if pad:  # padded graphs: zero features (+ identity adjacency below)
        x = jnp.concatenate([x, jnp.zeros((pad,) + x.shape[1:], x.dtype)], axis=0)
    x_flat = x.reshape(Bp * N, V * D_in).astype(jnp.bfloat16)

    # Additive f32 mask for the block-diagonal disjoint-union graph.
    # Self loops are (re)inserted so every softmax row has a finite entry.
    eye_n = jnp.eye(N, dtype=jnp.float32)
    if shared_adj:
        adj_f = jnp.maximum(adj.astype(jnp.float32), eye_n)          # [N, N]
        bd = jnp.kron(jnp.eye(bt, dtype=jnp.float32), adj_f)         # [M, M]
        mask_bias = jnp.where(bd > 0.5, 0.0, MASK_NEG).astype(jnp.float32)
        mask_spec = pl.BlockSpec((M, M), lambda g: (0, 0))           # resident
    else:
        adj_f = jnp.maximum(adj.astype(jnp.float32), eye_n)          # [B, N, N]
        if pad:
            adj_f = jnp.concatenate(
                [adj_f, jnp.broadcast_to(eye_n, (pad, N, N))], axis=0)
        eye_bt = jnp.eye(bt, dtype=jnp.float32)
        bd = jnp.einsum("pq,gprc->gprqc",
                        eye_bt, adj_f.reshape(G, bt, N, N)).reshape(G, M, M)
        mask_bias = jnp.where(bd > 0.5, 0.0, MASK_NEG)
        mask_bias = mask_bias.astype(jnp.float32).reshape(G * M, M)
        mask_spec = pl.BlockSpec((M, M), lambda g: (g, 0))

    w_aug1 = _augment_weights(params["w1"], params["att_src1"],
                              params["att_dst1"], V, d_pad).astype(jnp.bfloat16)
    b1 = params["bias1"].reshape(1, d_out).astype(jnp.float32)

    inputs = [x_flat, mask_bias, w_aug1, b1]
    in_specs = [
        pl.BlockSpec((M, V * D_in), lambda g: (g, 0)),
        mask_spec,
        pl.BlockSpec((V * D_in, d_pad), lambda g: (0, 0)),
        pl.BlockSpec((1, d_out), lambda g: (0, 0)),
    ]
    if two_layered:
        w_aug2 = _augment_weights(params["w2"], params["att_src2"],
                                  params["att_dst2"], 1, d_pad).astype(jnp.bfloat16)
        b2 = params["bias2"].reshape(1, d_out).astype(jnp.float32)
        inputs += [w_aug2, b2]
        in_specs += [
            pl.BlockSpec((d_out, d_pad), lambda g: (0, 0)),
            pl.BlockSpec((1, d_out), lambda g: (0, 0)),
        ]

    kernel = functools.partial(_gat_kernel, d_out=d_out, two_layered=two_layered)
    out = pl.pallas_call(
        kernel,
        out_shape=jax.ShapeDtypeStruct((Bp * N, d_out), jnp.float32),
        grid=(G,),
        in_specs=in_specs,
        out_specs=pl.BlockSpec((M, d_out), lambda g: (g, 0)),
        compiler_params=pltpu.CompilerParams(
            dimension_semantics=("parallel",)),
    )(*inputs)
    return out[:B * N].reshape(B, N, d_out)


# ----------------------------------------------------------------------------
# Model wrapper
# ----------------------------------------------------------------------------
class GATModelPallas:
    def __init__(self, key, in_size=DIRE_OUTPUT_SIZE,
                 embedding_size=EMBEDDING_SIZE, two_layered=False,
                 grid_steps=None):
        self.two_layered = two_layered
        self.grid_steps = grid_steps

        def glorot(k, shape):
            fan_in, fan_out = shape[0], shape[-1]
            limit = jnp.sqrt(6.0 / (fan_in + fan_out))
            return jax.random.uniform(k, shape, jnp.float32, -limit, limit)

        k = jax.random.split(key, 6)
        p = {
            "w1": glorot(k[0], (in_size, embedding_size)),
            "att_src1": glorot(k[1], (1, embedding_size)),
            "att_dst1": glorot(k[2], (1, embedding_size)),
            "bias1": jnp.zeros((1, embedding_size), jnp.float32),
        }
        if two_layered:
            p.update({
                "w2": glorot(k[3], (embedding_size, embedding_size)),
                "att_src2": glorot(k[4], (1, embedding_size)),
                "att_dst2": glorot(k[5], (1, embedding_size)),
                "bias2": jnp.zeros((1, embedding_size), jnp.float32),
            })
        self.params = p

    def __call__(self, function_variables_embedding, edge_index):
        x = function_variables_embedding
        single = (x.ndim == 3)               # [N, V, D] (original API) -> batch of 1
        if single:
            x = x[None]
        n = x.shape[1]
        if edge_index.ndim == 2:             # shared topology for the whole batch
            adj = dense_adjacency(edge_index, n)
            shared = True
        else:                                # per-graph edge_index [B, 2, E]
            adj = jax.vmap(lambda e: dense_adjacency(e, n))(edge_index)
            shared = False
        out = gat_forward_pallas(x, adj, self.params,
                                 two_layered=self.two_layered,
                                 shared_adj=shared,
                                 grid_steps=self.grid_steps)
        return out[0] if single else out


# ----------------------------------------------------------------------------
# Pure-JAX f32 reference (original, un-fused math) for a loose correctness check
# ----------------------------------------------------------------------------
def gat_reference(x, adj, params, two_layered):
    def layer(h_in, w, a_s, a_d, b, mask):
        h = h_in @ w
        alpha_src = jnp.sum(h * a_s, axis=-1, keepdims=True)
        alpha_dst = jnp.sum(h * a_d, axis=-1, keepdims=True)
        e = alpha_dst + jnp.swapaxes(alpha_src, -1, -2)
        e = jnp.where(e > 0, e, NEG_SLOPE * e)
        e = jnp.where(mask, e, MASK_NEG)
        p = jnp.exp(e - jnp.max(e, axis=-1, keepdims=True))
        p = jnp.where(mask, p, 0.0)
        alpha = p / jnp.sum(p, axis=-1, keepdims=True)
        return jnp.einsum("bij,bjf->bif", alpha, h) + b

    mask = adj > 0
    out = layer(x.mean(-2), params["w1"], params["att_src1"],
                params["att_dst1"], params["bias1"], mask)
    out = jnp.maximum(out, 0.0)
    if two_layered:
        out = layer(out, params["w2"], params["att_src2"],
                    params["att_dst2"], params["bias2"], mask)
    return out


# ----------------------------------------------------------------------------
if __name__ == "__main__":
    key = jax.random.PRNGKey(0)
    k_x, k_m1, k_m2 = jax.random.split(key, 3)

    B, N, V = 16, 8, 4     # 16 graphs, 8 nodes each, 4 variable embeddings/node
    x = jax.random.normal(k_x, (B, N, V, DIRE_OUTPUT_SIZE), jnp.float32)

    # Small directed graph shared by all graphs in the batch: ring + chords.
    src = jnp.array([0, 1, 2, 3, 4, 5, 6, 7, 0, 3], dtype=jnp.int32)
    dst = jnp.array([1, 2, 3, 4, 5, 6, 7, 0, 4, 7], dtype=jnp.int32)
    edge_index = jnp.stack([src, dst], axis=0)   # [2, E]

    adj_b = jnp.broadcast_to(dense_adjacency(edge_index, N) > 0, (B, N, N))

    # Single-layer model (GATConv + relu).
    model1 = GATModelPallas(k_m1, two_layered=False)
    out1 = jax.block_until_ready(model1(x, edge_index))
    assert out1.shape == (B, N, EMBEDDING_SIZE)
    assert bool(jnp.all(out1 >= 0.0))            # trailing ReLU applied

    # Two-layer model, fused into one kernel launch.
    model2 = GATModelPallas(k_m2, two_layered=True)
    out2 = jax.block_until_ready(model2(x, edge_index))
    assert out2.shape == (B, N, EMBEDDING_SIZE)

    # Loose-tolerance check vs the f32 reference (kernel matmuls run in bf16).
    ref1 = gat_reference(x, adj_b, model1.params, two_layered=False)
    ref2 = gat_reference(x, adj_b, model2.params, two_layered=True)
    err1 = float(jnp.max(jnp.abs(out1 - ref1)))
    err2 = float(jnp.max(jnp.abs(out2 - ref2)))
    assert err1 < 0.1, f"single-layer mismatch: {err1}"
    assert err2 < 0.15, f"two-layer mismatch: {err2}"

    # Per-graph edge_index path (block-diagonal mask built per grid step).
    edge_index_b = jnp.broadcast_to(edge_index[None],
                                    (B, 2, edge_index.shape[1]))
    out1b = jax.block_until_ready(model1(x, edge_index_b))
    assert float(jnp.max(jnp.abs(out1b - out1))) < 1e-4

    print("KERNEL_OK")
</pallas_src>

<mosaic_0001>
module attributes {stable_mosaic.version = 11 : i64} {
  func.func @_gat_kernel(%arg0: i32, %arg1: memref<128x256xbf16, #tpu.memory_space<vmem>>, %arg2: memref<128x128xf32, #tpu.memory_space<vmem>>, %arg3: memref<256x64xbf16, #tpu.memory_space<vmem>>, %arg4: memref<1x32xf32, #tpu.memory_space<vmem>>, %arg5: memref<128x32xf32, #tpu.memory_space<vmem>>) attributes {dimension_semantics = [#tpu.dimension_semantics<parallel>], iteration_bounds = array<i64: 1>, scalar_prefetch = 0 : i64, scratch_operands = 0 : i64, tpu.core_type = #tpu.core_type<tc>, window_params = [{transform_indices = @transform_0, window_bounds = array<i64: 128, 256>}, {pipeline_mode = #tpu.pipeline_mode<synchronous>, transform_indices = @transform_1, window_bounds = array<i64: 128, 128>}, {pipeline_mode = #tpu.pipeline_mode<synchronous>, transform_indices = @transform_2, window_bounds = array<i64: 256, 64>}, {pipeline_mode = #tpu.pipeline_mode<synchronous>, transform_indices = @transform_3, window_bounds = array<i64: 1, 32>}, {transform_indices = @transform_4, window_bounds = array<i64: 128, 32>}]} {
    %c0 = arith.constant 0 : index
    %c0_0 = arith.constant 0 : index
    %0 = vector.load %arg2[%c0, %c0_0] : memref<128x128xf32, #tpu.memory_space<vmem>>, vector<128x128xf32>
    %c0_1 = arith.constant 0 : index
    %c0_2 = arith.constant 0 : index
    %1 = vector.load %arg1[%c0_1, %c0_2] : memref<128x256xbf16, #tpu.memory_space<vmem>>, vector<128x256xbf16>
    %c0_3 = arith.constant 0 : index
    %c0_4 = arith.constant 0 : index
    %2 = vector.load %arg3[%c0_3, %c0_4] : memref<256x64xbf16, #tpu.memory_space<vmem>>, vector<256x64xbf16>
    %cst = arith.constant dense<0.000000e+00> : vector<128x64xf32>
    %3 = tpu.matmul %1, %2, %cst {dimension_numbers = #tpu.dot_dimension_numbers<[1], [0], [0], [1], [0, 0, 1, 1], [], []>} : vector<128x256xbf16>, vector<256x64xbf16>, vector<128x64xf32> -> vector<128x64xf32>
    %c0_5 = arith.constant 0 : index
    %c0_6 = arith.constant 0 : index
    %4 = vector.load %arg4[%c0_5, %c0_6] : memref<1x32xf32, #tpu.memory_space<vmem>>, vector<1x32xf32>
    %5 = vector.extract_strided_slice %3 {offsets = [0, 0], sizes = [128, 32], strides = [1, 1]} : vector<128x64xf32> to vector<128x32xf32>
    %6 = vector.extract_strided_slice %3 {offsets = [0, 32], sizes = [128, 1], strides = [1, 1]} : vector<128x64xf32> to vector<128x1xf32>
    %7 = tpu.transpose %6, [1, 0] : vector<128x1xf32> -> vector<1x128xf32>
    %8 = vector.extract_strided_slice %3 {offsets = [0, 33], sizes = [128, 1], strides = [1, 1]} : vector<128x64xf32> to vector<128x1xf32>
    %9 = vector.broadcast %8 : vector<128x1xf32> to vector<128x128xf32>
    %10 = vector.broadcast %7 : vector<1x128xf32> to vector<128x128xf32>
    %11 = arith.addf %9, %10 : vector<128x128xf32>
    %cst_7 = arith.constant 0.000000e+00 : f32
    %12 = vector.broadcast %cst_7 : f32 to vector<128x128xf32>
    %13 = arith.cmpf ogt, %11, %12 : vector<128x128xf32>
    %cst_8 = arith.constant 2.000000e-01 : f32
    %14 = vector.broadcast %cst_8 : f32 to vector<128x128xf32>
    %15 = arith.mulf %14, %11 : vector<128x128xf32>
    %16 = arith.select %13, %11, %15 : vector<128x128xi1>, vector<128x128xf32>
    %17 = arith.addf %16, %0 : vector<128x128xf32>
    %cst_9 = arith.constant dense<0xFF800000> : vector<128xf32>
    %18 = vector.multi_reduction <maximumf>, %17, %cst_9 [1] : vector<128x128xf32> to vector<128xf32>
    %19 = vector.shape_cast %18 : vector<128xf32> to vector<128x1xf32>
    %20 = vector.broadcast %19 : vector<128x1xf32> to vector<128x128xf32>
    %21 = arith.subf %17, %20 : vector<128x128xf32>
    %22 = math.exp %21 : vector<128x128xf32>
    %cst_10 = arith.constant dense<0.000000e+00> : vector<128xf32>
    %23 = vector.multi_reduction <add>, %22, %cst_10 [1] : vector<128x128xf32> to vector<128xf32>
    %24 = vector.shape_cast %23 : vector<128xf32> to vector<128x1xf32>
    %25 = tpu.reciprocal %24 {approx = true} : vector<128x1xf32> -> vector<128x1xf32>
    %26 = vector.broadcast %25 : vector<128x1xf32> to vector<128x128xf32>
    %27 = arith.mulf %22, %26 : vector<128x128xf32>
    %28 = arith.truncf %27 : vector<128x128xf32> to vector<128x128xbf16>
    %29 = arith.truncf %5 : vector<128x32xf32> to vector<128x32xbf16>
    %cst_11 = arith.constant dense<0.000000e+00> : vector<128x32xf32>
    %30 = tpu.matmul %28, %29, %cst_11 {dimension_numbers = #tpu.dot_dimension_numbers<[1], [0], [0], [1], [0, 0, 1, 1], [], []>} : vector<128x128xbf16>, vector<128x32xbf16>, vector<128x32xf32> -> vector<128x32xf32>
    %31 = vector.broadcast %4 : vector<1x32xf32> to vector<128x32xf32>
    %32 = arith.addf %30, %31 : vector<128x32xf32>
    %cst_12 = arith.constant 0.000000e+00 : f32
    %33 = vector.broadcast %cst_12 : f32 to vector<128x32xf32>
    %34 = arith.maximumf %32, %33 : vector<128x32xf32>
    %c0_13 = arith.constant 0 : index
    %c0_14 = arith.constant 0 : index
    %35 = vector.load %arg5[%c0_13, %c0_14] : memref<128x32xf32, #tpu.memory_space<vmem>>, vector<128x32xf32>
    tpu.vector_store %arg5[%c0_13, %c0_14], %34 {strides = array<i32>} : memref<128x32xf32, #tpu.memory_space<vmem>>, vector<128x32xf32>,
    return
  }
  func.func @transform_0(%arg0: i32) -> (i32, i32) {
    %c0_i32 = arith.constant 0 : i32
    %c0_i32_0 = arith.constant 0 : i32
    return %arg0, %c0_i32 : i32, i32
  }
  func.func @transform_1(%arg0: i32) -> (i32, i32) {
    %c0_i32 = arith.constant 0 : i32
    %c0_i32_0 = arith.constant 0 : i32
    %c0_i32_1 = arith.constant 0 : i32
    return %c0_i32, %c0_i32_0 : i32, i32
  }
  func.func @transform_2(%arg0: i32) -> (i32, i32) {
    %c0_i32 = arith.constant 0 : i32
    %c0_i32_0 = arith.constant 0 : i32
    %c0_i32_1 = arith.constant 0 : i32
    return %c0_i32, %c0_i32_0 : i32, i32
  }
  func.func @transform_3(%arg0: i32) -> (i32, i32) {
    %c0_i32 = arith.constant 0 : i32
    %c0_i32_0 = arith.constant 0 : i32
    %c0_i32_1 = arith.constant 0 : i32
    return %c0_i32, %c0_i32_0 : i32, i32
  }
  func.func @transform_4(%arg0: i32) -> (i32, i32) {
    %c0_i32 = arith.constant 0 : i32
    %c0_i32_0 = arith.constant 0 : i32
    return %arg0, %c0_i32 : i32, i32
  }
}

</mosaic_0001>

<llo_original>
// kernel: tpu_custom_call.1
$region0: #{tpu_custom_call.1}
  #allocation0 [shape = 'u32[]', space=smem, size = 0x4, offset = 0x4, fixed_abs, tag = 'smem constant byte address 0x4 - core index']
  #allocation1 [shape = 'u32[72,128]{1,0:T(1,128)}', space=vmem, size = 0x9000, scoped, tag = 'internal scratch']
  %s0 = inlined_call_operand.vmem [shape: bf16[128,256], index: 0, kind: input, shape index: {}]
  %s1 = inlined_call_operand.hbm [shape: f32[128,128], index: 1, kind: input, shape index: {}]
  %s2 = inlined_call_operand.vmem [shape: bf16[256,64], index: 2, kind: input, shape index: {}]
  %s3 = inlined_call_operand.vmem [shape: f32[1,32], index: 3, kind: input, shape index: {}]
  %s4 = inlined_call_operand.vmem [shape: f32[128,32], index: 4, kind: output, shape index: {}]
  %s5 = sld [smem:[#allocation0]]
  $region30: #{tpu_custom_call.1} parent=0
    _
  %s7 = ssub.s32 1, %s5
  %s8 = scalar_select 0, %s7, %s5
  $region1: #{tpu_custom_call.1} parent=0
    #allocation2 [shape = 'u8[65536]{0}', space=vmem, size = 0x10000, scoped, tag = 'input window, operand 1, single buffered']
    #allocation3 [shape = 's32[1]{0}', space=sflag, size = 0x4, scoped, tag = 'scoped memory for tpu_custom_call.1']
    %9 = vsyncpa [#allocation3], 0
    // Predicated region
    $region2: #{tpu_custom_call.1} parent=1 // pred_check
      _
    $region3: #{tpu_custom_call.1} parent=1 // pred_check_branch
      %11 = sbr.rel (0) target = $region5
    $region4: #{tpu_custom_call.1} parent=1 // pred_region
      _
    $region5: #{tpu_custom_call.1} parent=1 // pred_fallthru
      _
    // Predicated region
    $region6: #{tpu_custom_call.1} parent=1 // pred_check
      _
    $region7: #{tpu_custom_call.1} parent=1 // pred_check_branch
      %13 = sbr.rel (0) target = $region9
    $region8: #{tpu_custom_call.1} parent=1 // pred_region
      %15 = vsyncadd [#allocation3], 0
      %s16 = sshll.u32 %s1, 4
      %s17 = int_to_ptr.hbm [resolvable:$true] %s16
      %s18 = sshll.u32 [#allocation2], 4
      %s19 = int_to_ptr.vmem [resolvable:$true] %s18
      %24 = dma.hbm_to_vmem [thread:$0]  %s17, 2048, %s19, [#allocation3], 128, 128, 8
    $region9: #{tpu_custom_call.1} parent=1 // pred_fallthru
      _
    // Predicated region
    $region10: #{tpu_custom_call.1} parent=1 // pred_check
      _
    $region11: #{tpu_custom_call.1} parent=1 // pred_check_branch
      %26 = sbr.rel (0) target = $region13
    $region12: #{tpu_custom_call.1} parent=1 // pred_region
      _
    $region13: #{tpu_custom_call.1} parent=1 // pred_fallthru
      _
    // Predicated region
    $region14: #{tpu_custom_call.1} parent=1 // pred_check
      _
    $region15: #{tpu_custom_call.1} parent=1 // pred_check_branch
      %28 = sbr.rel (0) target = $region17
    $region16: #{tpu_custom_call.1} parent=1 // pred_region
      _
    $region17: #{tpu_custom_call.1} parent=1 // pred_fallthru
      _
    // Predicated region
    $region18: #{tpu_custom_call.1} parent=1 // pred_check
      _
    $region19: #{tpu_custom_call.1} parent=1 // pred_check_branch
      %30 = sbr.rel (0) target = $region21
    $region20: #{tpu_custom_call.1} parent=1 // pred_region
      %32 = dma.done [#allocation3], 2048
    $region21: #{tpu_custom_call.1} parent=1 // pred_fallthru
      _
    %v33 = vld [vmem:[#allocation2] sm:$0xff]
    %v34 = vld [vmem:[#allocation2 + $0x8] sm:$0xff]
    %v35 = vld [vmem:[#allocation2 + $0x10] sm:$0xff]
    %v36 = vld [vmem:[#allocation2 + $0x18] sm:$0xff]
    %v37 = vld [vmem:[#allocation2 + $0x20] sm:$0xff]
    %v38 = vld [vmem:[#allocation2 + $0x28] sm:$0xff]
    %v39 = vld [vmem:[#allocation2 + $0x30] sm:$0xff]
    %v40 = vld [vmem:[#allocation2 + $0x38] sm:$0xff]
    %v41 = vld [vmem:[#allocation2 + $0x40] sm:$0xff]
    %v42 = vld [vmem:[#allocation2 + $0x48] sm:$0xff]
    %v43 = vld [vmem:[#allocation2 + $0x50] sm:$0xff]
    %v44 = vld [vmem:[#allocation2 + $0x58] sm:$0xff]
    %v45 = vld [vmem:[#allocation2 + $0x60] sm:$0xff]
    %v46 = vld [vmem:[#allocation2 + $0x68] sm:$0xff]
    %v47 = vld [vmem:[#allocation2 + $0x70] sm:$0xff]
    %v48 = vld [vmem:[#allocation2 + $0x78] sm:$0xff]
    %v49 = vld [vmem:[%s0] sm:$0xff]
    %v50 = vld [vmem:[%s0 + $0x8] sm:$0xff]
    %v51 = vld [vmem:[%s0 + $0x10] sm:$0xff]
    %v52 = vld [vmem:[%s0 + $0x18] sm:$0xff]
    %v53 = vld [vmem:[%s0 + $0x20] sm:$0xff]
    %v54 = vld [vmem:[%s0 + $0x28] sm:$0xff]
    %v55 = vld [vmem:[%s0 + $0x30] sm:$0xff]
    %v56 = vld [vmem:[%s0 + $0x38] sm:$0xff]
    %v57 = vld [vmem:[%s0 + $0x40] sm:$0xff]
    %v58 = vld [vmem:[%s0 + $0x48] sm:$0xff]
    %v59 = vld [vmem:[%s0 + $0x50] sm:$0xff]
    %v60 = vld [vmem:[%s0 + $0x58] sm:$0xff]
    %v61 = vld [vmem:[%s0 + $0x60] sm:$0xff]
    %v62 = vld [vmem:[%s0 + $0x68] sm:$0xff]
    %v63 = vld [vmem:[%s0 + $0x70] sm:$0xff]
    %v64 = vld [vmem:[%s0 + $0x78] sm:$0xff]
    %v65 = vld [vmem:[%s2] sm:$0xf]
    %v66 = vld [vmem:[%s2 + $0x4] sm:$0xf]
    %v67 = vld [vmem:[%s2 + $0x8] sm:$0xf]
    %v68 = vld [vmem:[%s2 + $0xc] sm:$0xf]
    %v69 = vld [vmem:[%s2 + $0x10] sm:$0xf]
    %v70 = vld [vmem:[%s2 + $0x14] sm:$0xf]
    %v71 = vld [vmem:[%s2 + $0x18] sm:$0xf]
    %v72 = vld [vmem:[%s2 + $0x1c] sm:$0xf]
    %v73 = vld [vmem:[%s2 + $0x20] sm:$0xf]
    %v74 = vld [vmem:[%s2 + $0x24] sm:$0xf]
    %v75 = vld [vmem:[%s2 + $0x28] sm:$0xf]
    %v76 = vld [vmem:[%s2 + $0x2c] sm:$0xf]
    %v77 = vld [vmem:[%s2 + $0x30] sm:$0xf]
    %v78 = vld [vmem:[%s2 + $0x34] sm:$0xf]
    %v79 = vld [vmem:[%s2 + $0x38] sm:$0xf]
    %v80 = vld [vmem:[%s2 + $0x3c] sm:$0xf]
    %v81 = vld [vmem:[%s2 + $0x40] sm:$0xf]
    %v82 = vld [vmem:[%s2 + $0x44] sm:$0xf]
    %v83 = vld [vmem:[%s2 + $0x48] sm:$0xf]
    %v84 = vld [vmem:[%s2 + $0x4c] sm:$0xf]
    %v85 = vld [vmem:[%s2 + $0x50] sm:$0xf]
    %v86 = vld [vmem:[%s2 + $0x54] sm:$0xf]
    %v87 = vld [vmem:[%s2 + $0x58] sm:$0xf]
    %v88 = vld [vmem:[%s2 + $0x5c] sm:$0xf]
    %v89 = vld [vmem:[%s2 + $0x60] sm:$0xf]
    %v90 = vld [vmem:[%s2 + $0x64] sm:$0xf]
    %v91 = vld [vmem:[%s2 + $0x68] sm:$0xf]
    %v92 = vld [vmem:[%s2 + $0x6c] sm:$0xf]
    %v93 = vld [vmem:[%s2 + $0x70] sm:$0xf]
    %v94 = vld [vmem:[%s2 + $0x74] sm:$0xf]
    %v95 = vld [vmem:[%s2 + $0x78] sm:$0xf]
    %v96 = vld [vmem:[%s2 + $0x7c] sm:$0xf]
    %v113 = vunpack.c.l.b16 %v49
    %v114 = vunpack.c.h.b16 %v49
    %v115 = vunpack.c.l.b16 %v50
    %v116 = vunpack.c.h.b16 %v50
    %v117 = vunpack.c.l.b16 %v51
    %v118 = vunpack.c.h.b16 %v51
    %v119 = vunpack.c.l.b16 %v52
    %v120 = vunpack.c.h.b16 %v52
    %v121 = vunpack.c.l.b16 %v53
    %v122 = vunpack.c.h.b16 %v53
    %v123 = vunpack.c.l.b16 %v54
    %v124 = vunpack.c.h.b16 %v54
    %v125 = vunpack.c.l.b16 %v55
    %v126 = vunpack.c.h.b16 %v55
    %v127 = vunpack.c.l.b16 %v56
    %v128 = vunpack.c.h.b16 %v56
    %v129 = vunpack.c.l.b16 %v57
    %v130 = vunpack.c.h.b16 %v57
    %v131 = vunpack.c.l.b16 %v58
    %v132 = vunpack.c.h.b16 %v58
    %v133 = vunpack.c.l.b16 %v59
    %v134 = vunpack.c.h.b16 %v59
    %v135 = vunpack.c.l.b16 %v60
    %v136 = vunpack.c.h.b16 %v60
    %v137 = vunpack.c.l.b16 %v61
    %v138 = vunpack.c.h.b16 %v61
    %v139 = vunpack.c.l.b16 %v62
    %v140 = vunpack.c.h.b16 %v62
    %v141 = vunpack.c.l.b16 %v63
    %v142 = vunpack.c.h.b16 %v63
    %v143 = vunpack.c.l.b16 %v64
    %v144 = vunpack.c.h.b16 %v64
    %v145 = vpack.c.b16 %v115, %v113
    %v146 = vpack.c.b16 %v116, %v114
    %v147 = vpack.c.b16 %v119, %v117
    %v148 = vpack.c.b16 %v120, %v118
    %v149 = vpack.c.b16 %v123, %v121
    %v150 = vpack.c.b16 %v124, %v122
    %v151 = vpack.c.b16 %v127, %v125
    %v152 = vpack.c.b16 %v128, %v126
    %v153 = vpack.c.b16 %v131, %v129
    %v154 = vpack.c.b16 %v132, %v130
    %v155 = vpack.c.b16 %v135, %v133
    %v156 = vpack.c.b16 %v136, %v134
    %v157 = vpack.c.b16 %v139, %v137
    %v158 = vpack.c.b16 %v140, %v138
    %v159 = vpack.c.b16 %v143, %v141
    %v160 = vpack.c.b16 %v144, %v142
    %v209 = vunpack.c.l.b16 %v65
    %v210 = vunpack.c.l.b16 %v66
    %v211 = vunpack.c.l.b16 %v67
    %v212 = vunpack.c.l.b16 %v68
    %v213 = vunpack.c.l.b16 %v69
    %v214 = vunpack.c.l.b16 %v70
    %v215 = vunpack.c.l.b16 %v71
    %v216 = vunpack.c.l.b16 %v72
    %v217 = vunpack.c.l.b16 %v73
    %v218 = vunpack.c.l.b16 %v74
    %v219 = vunpack.c.l.b16 %v75
    %v220 = vunpack.c.l.b16 %v76
    %v221 = vunpack.c.l.b16 %v77
    %v222 = vunpack.c.l.b16 %v78
    %v223 = vunpack.c.l.b16 %v79
    %v224 = vunpack.c.l.b16 %v80
    %v225 = vunpack.c.l.b16 %v81
    %v226 = vunpack.c.l.b16 %v82
    %v227 = vunpack.c.l.b16 %v83
    %v228 = vunpack.c.l.b16 %v84
    %v229 = vunpack.c.l.b16 %v85
    %v230 = vunpack.c.l.b16 %v86
    %v231 = vunpack.c.l.b16 %v87
    %v232 = vunpack.c.l.b16 %v88
    %v233 = vunpack.c.l.b16 %v89
    %v234 = vunpack.c.l.b16 %v90
    %v235 = vunpack.c.l.b16 %v91
    %v236 = vunpack.c.l.b16 %v92
    %v237 = vunpack.c.l.b16 %v93
    %v238 = vunpack.c.l.b16 %v94
    %v239 = vunpack.c.l.b16 %v95
    %v240 = vunpack.c.l.b16 %v96
    %v241 = vpack.c.b16 %v210, %v209
    %v242 = vpack.c.b16 %v212, %v211
    %v243 = vpack.c.b16 %v214, %v213
    %v244 = vpack.c.b16 %v216, %v215
    %v245 = vpack.c.b16 %v218, %v217
    %v246 = vpack.c.b16 %v220, %v219
    %v247 = vpack.c.b16 %v222, %v221
    %v248 = vpack.c.b16 %v224, %v223
    %v249 = vpack.c.b16 %v226, %v225
    %v250 = vpack.c.b16 %v228, %v227
    %v251 = vpack.c.b16 %v230, %v229
    %v252 = vpack.c.b16 %v232, %v231
    %v253 = vpack.c.b16 %v234, %v233
    %v254 = vpack.c.b16 %v236, %v235
    %v255 = vpack.c.b16 %v238, %v237
    %v256 = vpack.c.b16 %v240, %v239
    %273 = vmatpush.bf16.msra.mxu0 %v248
    %274 = vmatpush.bf16.msra.mxu0 %v247
    %275 = vmatpush.bf16.msra.mxu0 %v246
    %276 = vmatpush.bf16.msra.mxu0 %v245
    %277 = vmatpush.bf16.msra.mxu0 %v244
    %278 = vmatpush.bf16.msra.mxu0 %v243
    %279 = vmatpush.bf16.msra.mxu0 %v242
    %280 = vmatpush.bf16.msra.mxu0 %v241
    %281 = vmatmul.bf16.gmra.mxu0 %v145
    %v282 = vpop.f32.mrf.mxu0
    %v283 = vadd.f32 0.0, %v282
    %v284 = vpop.f32.mrf.mxu0
    %v285 = vadd.f32 0.0, %v284
    %286 = vmatmul.bf16.gmra.mxu0 %v147
    %v287 = vpop.f32.mrf.mxu0
    %v288 = vadd.f32 0.0, %v287
    %v289 = vpop.f32.mrf.mxu0
    %v290 = vadd.f32 0.0, %v289
    %291 = vmatmul.bf16.gmra.mxu0 %v149
    %v292 = vpop.f32.mrf.mxu0
    %v293 = vadd.f32 0.0, %v292
    %v294 = vpop.f32.mrf.mxu0
    %v295 = vadd.f32 0.0, %v294
    %296 = vmatmul.bf16.gmra.mxu0 %v151
    %v297 = vpop.f32.mrf.mxu0
    %v298 = vadd.f32 0.0, %v297
    %v299 = vpop.f32.mrf.mxu0
    %v300 = vadd.f32 0.0, %v299
    %301 = vmatmul.bf16.gmra.mxu0 %v153
    %v302 = vpop.f32.mrf.mxu0
    %v303 = vadd.f32 0.0, %v302
    %v304 = vpop.f32.mrf.mxu0
    %v305 = vadd.f32 0.0, %v304
    %306 = vmatmul.bf16.gmra.mxu0 %v155
    %v307 = vpop.f32.mrf.mxu0
    %v308 = vadd.f32 0.0, %v307
    %v309 = vpop.f32.mrf.mxu0
    %v310 = vadd.f32 0.0, %v309
    %311 = vmatmul.bf16.gmra.mxu0 %v157
    %v312 = vpop.f32.mrf.mxu0
    %v313 = vadd.f32 0.0, %v312
    %v314 = vpop.f32.mrf.mxu0
    %v315 = vadd.f32 0.0, %v314
    %316 = vmatmul.bf16.gmra.mxu0 %v159
    %v317 = vpop.f32.mrf.mxu0
    %v318 = vadd.f32 0.0, %v317
    %v319 = vpop.f32.mrf.mxu0
    %v320 = vadd.f32 0.0, %v319
    %321 = vdwg.mxu0
    %322 = vmatpush.bf16.msra.mxu0 %v256
    %323 = vmatpush.bf16.msra.mxu0 %v255
    %324 = vmatpush.bf16.msra.mxu0 %v254
    %325 = vmatpush.bf16.msra.mxu0 %v253
    %326 = vmatpush.bf16.msra.mxu0 %v252
    %327 = vmatpush.bf16.msra.mxu0 %v251
    %328 = vmatpush.bf16.msra.mxu0 %v250
    %329 = vmatpush.bf16.msra.mxu0 %v249
    %330 = vmatmul.bf16.gmra.mxu0 %v146
    %v331 = vpop.f32.mrf.mxu0
    %v332 = vadd.f32 %v283, %v331
    %v333 = vpop.f32.mrf.mxu0
    %v334 = vadd.f32 %v285, %v333
    %335 = vmatmul.bf16.gmra.mxu0 %v148
    %v336 = vpop.f32.mrf.mxu0
    %v337 = vadd.f32 %v288, %v336
    %v338 = vpop.f32.mrf.mxu0
    %v339 = vadd.f32 %v290, %v338
    %340 = vmatmul.bf16.gmra.mxu0 %v150
    %v341 = vpop.f32.mrf.mxu0
    %v342 = vadd.f32 %v293, %v341
    %v343 = vpop.f32.mrf.mxu0
    %v344 = vadd.f32 %v295, %v343
    %345 = vmatmul.bf16.gmra.mxu0 %v152
    %v346 = vpop.f32.mrf.mxu0
    %v347 = vadd.f32 %v298, %v346
    %v348 = vpop.f32.mrf.mxu0
    %v349 = vadd.f32 %v300, %v348
    %350 = vmatmul.bf16.gmra.mxu0 %v154
    %v351 = vpop.f32.mrf.mxu0
    %v352 = vadd.f32 %v303, %v351
    %v353 = vpop.f32.mrf.mxu0
    %v354 = vadd.f32 %v305, %v353
    %355 = vmatmul.bf16.gmra.mxu0 %v156
    %v356 = vpop.f32.mrf.mxu0
    %v357 = vadd.f32 %v308, %v356
    %v358 = vpop.f32.mrf.mxu0
    %v359 = vadd.f32 %v310, %v358
    %360 = vmatmul.bf16.gmra.mxu0 %v158
    %v361 = vpop.f32.mrf.mxu0
    %v362 = vadd.f32 %v313, %v361
    %v363 = vpop.f32.mrf.mxu0
    %v364 = vadd.f32 %v315, %v363
    %365 = vmatmul.bf16.gmra.mxu0 %v160
    %v366 = vpop.f32.mrf.mxu0
    %v367 = vadd.f32 %v318, %v366
    %v368 = vpop.f32.mrf.mxu0
    %v369 = vadd.f32 %v320, %v368
    %370 = vdwg.mxu0
    %v371 = vld [vmem:[%s3] sm:$0x1]
    %388 = vrot.lane.b32.xlu0 %v332, 96
    %v389 = vpop.permute.xlu0 %388
    %390 = vrot.lane.b32.xlu0 %v334, 96
    %v391 = vpop.permute.xlu0 %390
    %392 = vrot.lane.b32.xlu0 %v337, 96
    %v393 = vpop.permute.xlu0 %392
    %394 = vrot.lane.b32.xlu0 %v339, 96
    %v395 = vpop.permute.xlu0 %394
    %396 = vrot.lane.b32.xlu0 %v342, 96
    %v397 = vpop.permute.xlu0 %396
    %398 = vrot.lane.b32.xlu0 %v344, 96
    %v399 = vpop.permute.xlu0 %398
    %400 = vrot.lane.b32.xlu0 %v347, 96
    %v401 = vpop.permute.xlu0 %400
    %402 = vrot.lane.b32.xlu0 %v349, 96
    %v403 = vpop.permute.xlu0 %402
    %404 = vrot.lane.b32.xlu0 %v352, 96
    %v405 = vpop.permute.xlu0 %404
    %406 = vrot.lane.b32.xlu0 %v354, 96
    %v407 = vpop.permute.xlu0 %406
    %408 = vrot.lane.b32.xlu0 %v357, 96
    %v409 = vpop.permute.xlu0 %408
    %410 = vrot.lane.b32.xlu0 %v359, 96
    %v411 = vpop.permute.xlu0 %410
    %412 = vrot.lane.b32.xlu0 %v362, 96
    %v413 = vpop.permute.xlu0 %412
    %414 = vrot.lane.b32.xlu0 %v364, 96
    %v415 = vpop.permute.xlu0 %414
    %416 = vrot.lane.b32.xlu0 %v367, 96
    %v417 = vpop.permute.xlu0 %416
    %418 = vrot.lane.b32.xlu0 %v369, 96
    %v419 = vpop.permute.xlu0 %418
    %436 = vxpose.xlu0.b32.start [1/16] %v389, 128
    %437 = vxpose.xlu0.b32.cont [2/16] %v391, 128
    %438 = vxpose.xlu0.b32.cont [3/16] %v393, 128
    %439 = vxpose.xlu0.b32.cont [4/16] %v395, 128
    %440 = vxpose.xlu0.b32.cont [5/16] %v397, 128
    %441 = vxpose.xlu0.b32.cont [6/16] %v399, 128
    %442 = vxpose.xlu0.b32.cont [7/16] %v401, 128
    %443 = vxpose.xlu0.b32.cont [8/16] %v403, 128
    %444 = vxpose.xlu0.b32.cont [9/16] %v405, 128
    %445 = vxpose.xlu0.b32.cont [10/16] %v407, 128
    %446 = vxpose.xlu0.b32.cont [11/16] %v409, 128
    %447 = vxpose.xlu0.b32.cont [12/16] %v411, 128
    %448 = vxpose.xlu0.b32.cont [13/16] %v413, 128
    %449 = vxpose.xlu0.b32.cont [14/16] %v415, 128
    %450 = vxpose.xlu0.b32.cont [15/16] %v417, 128
    %451 = vxpose.xlu0.b32.end [16/16] %v419, 128
    %v452 = vpop.trf.xlu0
    %v453 = vpop.trf.xlu0
    %v454 = vpop.trf.xlu0
    %v455 = vpop.trf.xlu0
    %v456 = vpop.trf.xlu0
    %v457 = vpop.trf.xlu0
    %v458 = vpop.trf.xlu0
    %v459 = vpop.trf.xlu0
    %v460 = vpop.trf.xlu0
    %v461 = vpop.trf.xlu0
    %v462 = vpop.trf.xlu0
    %v463 = vpop.trf.xlu0
    %v464 = vpop.trf.xlu0
    %v465 = vpop.trf.xlu0
    %v466 = vpop.trf.xlu0
    %v467 = vpop.trf.xlu0
    %468 = vset.pattern.permute.xlu0 33
    %469 = vperm.xlu0 %468, %v332
    %v470 = vpop.permute.xlu0 %469
    %472 = vset.pattern.permute.xlu0 33
    %473 = vperm.xlu0 %472, %v334
    %v474 = vpop.permute.xlu0 %473
    %476 = vset.pattern.permute.xlu0 33
    %477 = vperm.xlu0 %476, %v337
    %v478 = vpop.permute.xlu0 %477
    %480 = vset.pattern.permute.xlu0 33
    %481 = vperm.xlu0 %480, %v339
    %v482 = vpop.permute.xlu0 %481
    %484 = vset.pattern.permute.xlu0 33
    %485 = vperm.xlu0 %484, %v342
    %v486 = vpop.permute.xlu0 %485
    %488 = vset.pattern.permute.xlu0 33
    %489 = vperm.xlu0 %488, %v344
    %v490 = vpop.permute.xlu0 %489
    %492 = vset.pattern.permute.xlu0 33
    %493 = vperm.xlu0 %492, %v347
    %v494 = vpop.permute.xlu0 %493
    %496 = vset.pattern.permute.xlu0 33
    %497 = vperm.xlu0 %496, %v349
    %v498 = vpop.permute.xlu0 %497
    %500 = vset.pattern.permute.xlu0 33
    %501 = vperm.xlu0 %500, %v352
    %v502 = vpop.permute.xlu0 %501
    %504 = vset.pattern.permute.xlu0 33
    %505 = vperm.xlu0 %504, %v354
    %v506 = vpop.permute.xlu0 %505
    %508 = vset.pattern.permute.xlu0 33
    %509 = vperm.xlu0 %508, %v357
    %v510 = vpop.permute.xlu0 %509
    %512 = vset.pattern.permute.xlu0 33
    %513 = vperm.xlu0 %512, %v359
    %v514 = vpop.permute.xlu0 %513
    %516 = vset.pattern.permute.xlu0 33
    %517 = vperm.xlu0 %516, %v362
    %v518 = vpop.permute.xlu0 %517
    %520 = vset.pattern.permute.xlu0 33
    %521 = vperm.xlu0 %520, %v364
    %v522 = vpop.permute.xlu0 %521
    %524 = vset.pattern.permute.xlu0 33
    %525 = vperm.xlu0 %524, %v367
    %v526 = vpop.permute.xlu0 %525
    %528 = vset.pattern.permute.xlu0 33
    %529 = vperm.xlu0 %528, %v369
    %v530 = vpop.permute.xlu0 %529
    %v532 = vperm.slane %v452, 0
    %v533 = vadd.f32 %v470, %v532
    %v534 = vadd.f32 %v474, %v532
    %v535 = vadd.f32 %v478, %v532
    %v536 = vadd.f32 %v482, %v532
    %v537 = vadd.f32 %v486, %v532
    %v538 = vadd.f32 %v490, %v532
    %v539 = vadd.f32 %v494, %v532
    %v540 = vadd.f32 %v498, %v532
    %v541 = vadd.f32 %v502, %v532
    %v542 = vadd.f32 %v506, %v532
    %v543 = vadd.f32 %v510, %v532
    %v544 = vadd.f32 %v514, %v532
    %v545 = vadd.f32 %v518, %v532
    %v546 = vadd.f32 %v522, %v532
    %v547 = vadd.f32 %v526, %v532
    %v548 = vadd.f32 %v530, %v532
    %vm549 = vcmp.gt.f32.partialorder %v533, 0.0
    %vm550 = vcmp.gt.f32.partialorder %v534, 0.0
    %vm551 = vcmp.gt.f32.partialorder %v535, 0.0
    %vm552 = vcmp.gt.f32.partialorder %v536, 0.0
    %vm553 = vcmp.gt.f32.partialorder %v537, 0.0
    %vm554 = vcmp.gt.f32.partialorder %v538, 0.0
    %vm555 = vcmp.gt.f32.partialorder %v539, 0.0
    %vm556 = vcmp.gt.f32.partialorder %v540, 0.0
    %vm557 = vcmp.gt.f32.partialorder %v541, 0.0
    %vm558 = vcmp.gt.f32.partialorder %v542, 0.0
    %vm559 = vcmp.gt.f32.partialorder %v543, 0.0
    %vm560 = vcmp.gt.f32.partialorder %v544, 0.0
    %vm561 = vcmp.gt.f32.partialorder %v545, 0.0
    %vm562 = vcmp.gt.f32.partialorder %v546, 0.0
    %vm563 = vcmp.gt.f32.partialorder %v547, 0.0
    %vm564 = vcmp.gt.f32.partialorder %v548, 0.0
    %v565 = vmul.f32 %v533, 0.2
    %v566 = vmul.f32 %v534, 0.2
    %v567 = vmul.f32 %v535, 0.2
    %v568 = vmul.f32 %v536, 0.2
    %v569 = vmul.f32 %v537, 0.2
    %v570 = vmul.f32 %v538, 0.2
    %v571 = vmul.f32 %v539, 0.2
    %v572 = vmul.f32 %v540, 0.2
    %v573 = vmul.f32 %v541, 0.2
    %v574 = vmul.f32 %v542, 0.2
    %v575 = vmul.f32 %v543, 0.2
    %v576 = vmul.f32 %v544, 0.2
    %v577 = vmul.f32 %v545, 0.2
    %v578 = vmul.f32 %v546, 0.2
    %v579 = vmul.f32 %v547, 0.2
    %v580 = vmul.f32 %v548, 0.2
    %v581 = vsel %vm549, %v533, %v565
    %v582 = vsel %vm550, %v534, %v566
    %v583 = vsel %vm551, %v535, %v567
    %v584 = vsel %vm552, %v536, %v568
    %v585 = vsel %vm553, %v537, %v569
    %v586 = vsel %vm554, %v538, %v570
    %v587 = vsel %vm555, %v539, %v571
    %v588 = vsel %vm556, %v540, %v572
    %v589 = vsel %vm557, %v541, %v573
    %v590 = vsel %vm558, %v542, %v574
    %v591 = vsel %vm559, %v543, %v575
    %v592 = vsel %vm560, %v544, %v576
    %v593 = vsel %vm561, %v545, %v577
    %v594 = vsel %vm562, %v546, %v578
    %v595 = vsel %vm563, %v547, %v579
    %v596 = vsel %vm564, %v548, %v580
    %v597 = vadd.f32 %v581, %v33
    %v598 = vadd.f32 %v582, %v34
    %v599 = vadd.f32 %v583, %v35
    %v600 = vadd.f32 %v584, %v36
    %v601 = vadd.f32 %v585, %v37
    %v602 = vadd.f32 %v586, %v38
    %v603 = vadd.f32 %v587, %v39
    %v604 = vadd.f32 %v588, %v40
    %v605 = vadd.f32 %v589, %v41
    %v606 = vadd.f32 %v590, %v42
    %v607 = vadd.f32 %v591, %v43
    %v608 = vadd.f32 %v592, %v44
    %v609 = vadd.f32 %v593, %v45
    %v610 = vadd.f32 %v594, %v46
    %v611 = vadd.f32 %v595, %v47
    %v612 = vadd.f32 %v596, %v48
    %613 = vmax.xlane.f32.xlu0 %v597
    %v614 = vpop.xlane.xlu0 %613
    %615 = vmax.xlane.f32.xlu0 %v598
    %v616 = vpop.xlane.xlu0 %615
    %617 = vmax.xlane.f32.xlu0 %v599
    %v618 = vpop.xlane.xlu0 %617
    %619 = vmax.xlane.f32.xlu0 %v600
    %v620 = vpop.xlane.xlu0 %619
    %621 = vmax.xlane.f32.xlu0 %v601
    %v622 = vpop.xlane.xlu0 %621
    %623 = vmax.xlane.f32.xlu0 %v602
    %v624 = vpop.xlane.xlu0 %623
    %625 = vmax.xlane.f32.xlu0 %v603
    %v626 = vpop.xlane.xlu0 %625
    %627 = vmax.xlane.f32.xlu0 %v604
    %v628 = vpop.xlane.xlu0 %627
    %629 = vmax.xlane.f32.xlu0 %v605
    %v630 = vpop.xlane.xlu0 %629
    %631 = vmax.xlane.f32.xlu0 %v606
    %v632 = vpop.xlane.xlu0 %631
    %633 = vmax.xlane.f32.xlu0 %v607
    %v634 = vpop.xlane.xlu0 %633
    %635 = vmax.xlane.f32.xlu0 %v608
    %v636 = vpop.xlane.xlu0 %635
    %637 = vmax.xlane.f32.xlu0 %v609
    %v638 = vpop.xlane.xlu0 %637
    %639 = vmax.xlane.f32.xlu0 %v610
    %v640 = vpop.xlane.xlu0 %639
    %641 = vmax.xlane.f32.xlu0 %v611
    %v642 = vpop.xlane.xlu0 %641
    %643 = vmax.xlane.f32.xlu0 %v612
    %v644 = vpop.xlane.xlu0 %643
    %v645 = vsub.f32 %v597, %v614
    %v646 = vsub.f32 %v598, %v616
    %v647 = vsub.f32 %v599, %v618
    %v648 = vsub.f32 %v600, %v620
    %v649 = vsub.f32 %v601, %v622
    %v650 = vsub.f32 %v602, %v624
    %v651 = vsub.f32 %v603, %v626
    %v652 = vsub.f32 %v604, %v628
    %v653 = vsub.f32 %v605, %v630
    %v654 = vsub.f32 %v606, %v632
    %v655 = vsub.f32 %v607, %v634
    %v656 = vsub.f32 %v608, %v636
    %v657 = vsub.f32 %v609, %v638
    %v658 = vsub.f32 %v610, %v640
    %v659 = vsub.f32 %v611, %v642
    %v660 = vsub.f32 %v612, %v644
    %v661 = vmul.f32 %v645, 1.442695
    %v662 = vpow.pop %v661
    %v663 = vmul.f32 %v646, 1.442695
    %v664 = vpow.pop %v663
    %v665 = vmul.f32 %v647, 1.442695
    %v666 = vpow.pop %v665
    %v667 = vmul.f32 %v648, 1.442695
    %v668 = vpow.pop %v667
    %v669 = vmul.f32 %v649, 1.442695
    %v670 = vpow.pop %v669
    %v671 = vmul.f32 %v650, 1.442695
    %v672 = vpow.pop %v671
    %v673 = vmul.f32 %v651, 1.442695
    %v674 = vpow.pop %v673
    %v675 = vmul.f32 %v652, 1.442695
    %v676 = vpow.pop %v675
    %v677 = vmul.f32 %v653, 1.442695
    %v678 = vpow.pop %v677
    %v679 = vmul.f32 %v654, 1.442695
    %v680 = vpow.pop %v679
    %v681 = vmul.f32 %v655, 1.442695
    %v682 = vpow.pop %v681
    %v683 = vmul.f32 %v656, 1.442695
    %v684 = vpow.pop %v683
    %v685 = vmul.f32 %v657, 1.442695
    %v686 = vpow.pop %v685
    %v687 = vmul.f32 %v658, 1.442695
    %v688 = vpow.pop %v687
    %v689 = vmul.f32 %v659, 1.442695
    %v690 = vpow.pop %v689
    %v691 = vmul.f32 %v660, 1.442695
    %v692 = vpow.pop %v691
    %693 = vadd.xlane.f32.xlu0 %v662
    %v694 = vpop.xlane.xlu0 %693
    %695 = vadd.xlane.f32.xlu0 %v664
    %v696 = vpop.xlane.xlu0 %695
    %697 = vadd.xlane.f32.xlu0 %v666
    %v698 = vpop.xlane.xlu0 %697
    %699 = vadd.xlane.f32.xlu0 %v668
    %v700 = vpop.xlane.xlu0 %699
    %701 = vadd.xlane.f32.xlu0 %v670
    %v702 = vpop.xlane.xlu0 %701
    %703 = vadd.xlane.f32.xlu0 %v672
    %v704 = vpop.xlane.xlu0 %703
    %705 = vadd.xlane.f32.xlu0 %v674
    %v706 = vpop.xlane.xlu0 %705
    %707 = vadd.xlane.f32.xlu0 %v676
    %v708 = vpop.xlane.xlu0 %707
    %709 = vadd.xlane.f32.xlu0 %v678
    %v710 = vpop.xlane.xlu0 %709
    %711 = vadd.xlane.f32.xlu0 %v680
    %v712 = vpop.xlane.xlu0 %711
    %713 = vadd.xlane.f32.xlu0 %v682
    %v714 = vpop.xlane.xlu0 %713
    %715 = vadd.xlane.f32.xlu0 %v684
    %v716 = vpop.xlane.xlu0 %715
    %717 = vadd.xlane.f32.xlu0 %v686
    %v718 = vpop.xlane.xlu0 %717
    %719 = vadd.xlane.f32.xlu0 %v688
    %v720 = vpop.xlane.xlu0 %719
    %721 = vadd.xlane.f32.xlu0 %v690
    %v722 = vpop.xlane.xlu0 %721
    %723 = vadd.xlane.f32.xlu0 %v692
    %v724 = vpop.xlane.xlu0 %723
    %v725 = vrcp.pop %v694
    %v726 = vrcp.pop %v696
    %v727 = vrcp.pop %v698
    %v728 = vrcp.pop %v700
    %v729 = vrcp.pop %v702
    %v730 = vrcp.pop %v704
    %v731 = vrcp.pop %v706
    %v732 = vrcp.pop %v708
    %v733 = vrcp.pop %v710
    %v734 = vrcp.pop %v712
    %v735 = vrcp.pop %v714
    %v736 = vrcp.pop %v716
    %v737 = vrcp.pop %v718
    %v738 = vrcp.pop %v720
    %v739 = vrcp.pop %v722
    %v740 = vrcp.pop %v724
    %v741 = vmul.f32 %v662, %v725
    %v742 = vmul.f32 %v664, %v726
    %v743 = vmul.f32 %v666, %v727
    %v744 = vmul.f32 %v668, %v728
    %v745 = vmul.f32 %v670, %v729
    %v746 = vmul.f32 %v672, %v730
    %v747 = vmul.f32 %v674, %v731
    %v748 = vmul.f32 %v676, %v732
    %v749 = vmul.f32 %v678, %v733
    %v750 = vmul.f32 %v680, %v734
    %v751 = vmul.f32 %v682, %v735
    %v752 = vmul.f32 %v684, %v736
    %v753 = vmul.f32 %v686, %v737
    %v754 = vmul.f32 %v688, %v738
    %v755 = vmul.f32 %v690, %v739
    %v756 = vmul.f32 %v692, %v740
    %v757 = vpack.c.bf16 %v742, %v741
    %v758 = vpack.c.bf16 %v744, %v743
    %v759 = vpack.c.bf16 %v746, %v745
    %v760 = vpack.c.bf16 %v748, %v747
    %v761 = vpack.c.bf16 %v750, %v749
    %v762 = vpack.c.bf16 %v752, %v751
    %v763 = vpack.c.bf16 %v754, %v753
    %v764 = vpack.c.bf16 %v756, %v755
    %v765 = vpack.c.bf16 %v334, %v332
    %v766 = vpack.c.bf16 %v339, %v337
    %v767 = vpack.c.bf16 %v344, %v342
    %v768 = vpack.c.bf16 %v349, %v347
    %v769 = vpack.c.bf16 %v354, %v352
    %v770 = vpack.c.bf16 %v359, %v357
    %v771 = vpack.c.bf16 %v364, %v362
    %v772 = vpack.c.bf16 %v369, %v367
    %v774 = vperm.slane %v371, 0
    %776 = vmatpush.bf16.msra.mxu0 %v772
    %777 = vmatpush.bf16.msra.mxu0 %v771
    %778 = vmatpush.bf16.msra.mxu0 %v770
    %779 = vmatpush.bf16.msra.mxu0 %v769
    %780 = vmatpush.bf16.msra.mxu0 %v768
    %781 = vmatpush.bf16.msra.mxu0 %v767
    %782 = vmatpush.bf16.msra.mxu0 %v766
    %783 = vmatpush.bf16.msra.mxu0 %v765
    %784 = vmatmul.bf16.gmra.mxu0 %v757
    %v785 = vpop.f32.mrf.mxu0
    %v786 = vadd.f32 %v774, %v785
    %v787 = vpop.f32.mrf.mxu0
    %v788 = vadd.f32 %v774, %v787
    %789 = vmatmul.bf16.gmra.mxu0 %v758
    %v790 = vpop.f32.mrf.mxu0
    %v791 = vadd.f32 %v774, %v790
    %v792 = vpop.f32.mrf.mxu0
    %v793 = vadd.f32 %v774, %v792
    %794 = vmatmul.bf16.gmra.mxu0 %v759
    %v795 = vpop.f32.mrf.mxu0
    %v796 = vadd.f32 %v774, %v795
    %v797 = vpop.f32.mrf.mxu0
    %v798 = vadd.f32 %v774, %v797
    %799 = vmatmul.bf16.gmra.mxu0 %v760
    %v800 = vpop.f32.mrf.mxu0
    %v801 = vadd.f32 %v774, %v800
    %v802 = vpop.f32.mrf.mxu0
    %v803 = vadd.f32 %v774, %v802
    %804 = vmatmul.bf16.gmra.mxu0 %v761
    %v805 = vpop.f32.mrf.mxu0
    %v806 = vadd.f32 %v774, %v805
    %v807 = vpop.f32.mrf.mxu0
    %v808 = vadd.f32 %v774, %v807
    %809 = vmatmul.bf16.gmra.mxu0 %v762
    %v810 = vpop.f32.mrf.mxu0
    %v811 = vadd.f32 %v774, %v810
    %v812 = vpop.f32.mrf.mxu0
    %v813 = vadd.f32 %v774, %v812
    %814 = vmatmul.bf16.gmra.mxu0 %v763
    %v815 = vpop.f32.mrf.mxu0
    %v816 = vadd.f32 %v774, %v815
    %v817 = vpop.f32.mrf.mxu0
    %v818 = vadd.f32 %v774, %v817
    %819 = vmatmul.bf16.gmra.mxu0 %v764
    %v820 = vpop.f32.mrf.mxu0
    %v821 = vadd.f32 %v774, %v820
    %v822 = vpop.f32.mrf.mxu0
    %v823 = vadd.f32 %v774, %v822
    %824 = vdwg.mxu0
    %v825 = vmax.f32 %v786, 0.0
    %v826 = vmax.f32 %v788, 0.0
    %v827 = vmax.f32 %v791, 0.0
    %v828 = vmax.f32 %v793, 0.0
    %v829 = vmax.f32 %v796, 0.0
    %v830 = vmax.f32 %v798, 0.0
    %v831 = vmax.f32 %v801, 0.0
    %v832 = vmax.f32 %v803, 0.0
    %v833 = vmax.f32 %v806, 0.0
    %v834 = vmax.f32 %v808, 0.0
    %v835 = vmax.f32 %v811, 0.0
    %v836 = vmax.f32 %v813, 0.0
    %v837 = vmax.f32 %v816, 0.0
    %v838 = vmax.f32 %v818, 0.0
    %v839 = vmax.f32 %v821, 0.0
    %v840 = vmax.f32 %v823, 0.0
    %vm841 = vcmask 261120
    %842 = vst.msk [vmem:[%s4] sm:$0xff] %vm841, %v825
    %843 = vst.msk [vmem:[%s4 + $0x8] sm:$0xff] %vm841, %v826
    %844 = vst.msk [vmem:[%s4 + $0x10] sm:$0xff] %vm841, %v827
    %845 = vst.msk [vmem:[%s4 + $0x18] sm:$0xff] %vm841, %v828
    %846 = vst.msk [vmem:[%s4 + $0x20] sm:$0xff] %vm841, %v829
    %847 = vst.msk [vmem:[%s4 + $0x28] sm:$0xff] %vm841, %v830
    %848 = vst.msk [vmem:[%s4 + $0x30] sm:$0xff] %vm841, %v831
    %849 = vst.msk [vmem:[%s4 + $0x38] sm:$0xff] %vm841, %v832
    %850 = vst.msk [vmem:[%s4 + $0x40] sm:$0xff] %vm841, %v833
    %851 = vst.msk [vmem:[%s4 + $0x48] sm:$0xff] %vm841, %v834
    %852 = vst.msk [vmem:[%s4 + $0x50] sm:$0xff] %vm841, %v835
    %853 = vst.msk [vmem:[%s4 + $0x58] sm:$0xff] %vm841, %v836
    %854 = vst.msk [vmem:[%s4 + $0x60] sm:$0xff] %vm841, %v837
    %855 = vst.msk [vmem:[%s4 + $0x68] sm:$0xff] %vm841, %v838
    %856 = vst.msk [vmem:[%s4 + $0x70] sm:$0xff] %vm841, %v839
    %857 = vst.msk [vmem:[%s4 + $0x78] sm:$0xff] %vm841, %v840
    // Predicated region
    $region22: #{tpu_custom_call.1} parent=1 // pred_check
      _
    $region23: #{tpu_custom_call.1} parent=1 // pred_check_branch
      %859 = sbr.rel (0) target = $region25
    $region24: #{tpu_custom_call.1} parent=1 // pred_region
      _
    $region25: #{tpu_custom_call.1} parent=1 // pred_fallthru
      _
    // Predicated region
    $region26: #{tpu_custom_call.1} parent=1 // pred_check
      _
    $region27: #{tpu_custom_call.1} parent=1 // pred_check_branch
      %861 = sbr.rel (0) target = $region29
    $region28: #{tpu_custom_call.1} parent=1 // pred_region
      _
    $region29: #{tpu_custom_call.1} parent=1 // pred_fallthru
      _
    %862 = vsyncpa [#allocation3], 1

</llo_original>
